<compile_context>
chip_gen: v7x
topology: tpu7x:2x2x1
jax: 0.10.0
libtpu: 0.0.40
codegen_flags: <defaults>
</compile_context>

<pallas_src>
import jax
import jax.numpy as jnp
from jax.experimental import pallas as pl
from jax.experimental.pallas import tpu as pltpu


def _fused_clip_kernel(x_ref, w_ref, bias_ref, o_ref):
    """Single fused MXU pass: logits = x @ W_fused + bias.

    x_ref:    (TILE_B, K)     bf16  flattened images (K = C*H*W, lane-dense)
    w_ref:    (K, N_pad)      bf16  (scale ⊙ w_enc) @ (tau * clip_weights), 0-padded cols
    bias_ref: (1, N_pad)      f32   renorm bias pushed through both linears
    o_ref:    (TILE_B, N_pad) f32   logits (padded columns hold only the bias constant)
    """
    o_ref[...] = (
        jnp.dot(x_ref[...], w_ref[...], preferred_element_type=jnp.float32)
        + bias_ref[...]
    )


def clip_zero_shot_forward(x, params, tau=12.0):
    B, C, H, W = x.shape
    HW = H * W
    K = C * HW
    f32 = jnp.float32

    # TODO(synk): bicubic F.interpolate branch (only taken when H == 32) not implemented.
    # TODO(synk): real CLIP RN50/ViT encode_image is a black-box checkpoint; a
    #             deterministic linear encoder (w_enc) stands in for it.
    # TODO(synk): the matmul collapse below is only valid while the encoder stand-in is
    #             linear; keep two MXU passes once a nonlinear encoder replaces it.

    old_mean = params["old_mean"].astype(f32)
    old_std = params["old_std"].astype(f32)
    new_mean = params["new_mean"].astype(f32)
    new_std = params["new_std"].astype(f32)

    # Fold the two affine renorms into one scale/bias per flattened position
    # (channel-major repeat matches PyTorch .reshape(B, -1) ordering).
    scale_c = old_std / new_std
    bias_c = (old_mean - new_mean) / new_std
    scale_row = jnp.repeat(scale_c, HW)            # (K,)
    bias_row = jnp.repeat(bias_c, HW)              # (K,)

    # Fold tau into the classifier weights, zero-pad classes to a lane-dense width.
    w_enc = params["w_enc"].astype(f32)            # (K, D)
    w_clip = params["clip_weights"].astype(f32)    # (D, NC)
    D, NC = w_clip.shape
    N_pad = max(128, ((NC + 127) // 128) * 128)
    w_clip_scaled = jnp.zeros((D, N_pad), f32).at[:, :NC].set(tau * w_clip)

    # Collapse renorm + encoder + classifier into one weight / one bias row (f32 math,
    # constant-folded under jit), then cast the fused weight to bf16 for the MXU.
    #   (x*scale + bias) @ w_enc @ (tau*w_clip)
    #     = x @ [(scale[:,None]*w_enc) @ (tau*w_clip)] + [bias @ w_enc @ (tau*w_clip)]
    w_fused = (scale_row[:, None] * w_enc) @ w_clip_scaled        # (K, N_pad)
    bias_out = (bias_row[None, :] @ w_enc) @ w_clip_scaled        # (1, N_pad)
    w_fused_bf16 = w_fused.astype(jnp.bfloat16)
    bias_out_f32 = bias_out.astype(f32)

    # Fixed batch tile (review): 512 for large batches; for small batches a single
    # 16-aligned tile (bf16 sublane packing). Never the whole unbounded batch.
    TILE_B = 512
    if B < TILE_B:
        TILE_B = ((max(B, 16) + 15) // 16) * 16
    num_tiles = pl.cdiv(B, TILE_B)
    B_pad = num_tiles * TILE_B

    # Flatten row-major (matches .reshape(B, -1)), cast to bf16 and pad the batch.
    # Under jit the reshape/cast/pad fuse into one producer pass feeding the kernel.
    x_flat = x.reshape(B, K).astype(jnp.bfloat16)
    if B_pad != B:
        x_flat = jnp.pad(x_flat, ((0, B_pad - B), (0, 0)))

    grid = (num_tiles,)

    flops = 2 * B_pad * K * N_pad + B_pad * N_pad
    bytes_accessed = (
        B_pad * K * 2            # x (bf16)
        + K * N_pad * 2          # fused weight (bf16)
        + N_pad * 4              # bias row
        + B_pad * N_pad * 4      # logits out (f32)
    )

    logits_padded = pl.pallas_call(
        _fused_clip_kernel,
        out_shape=jax.ShapeDtypeStruct((B_pad, N_pad), f32),
        grid_spec=pltpu.PrefetchScalarGridSpec(
            num_scalar_prefetch=0,
            grid=grid,
            in_specs=[
                pl.BlockSpec((TILE_B, K), lambda i: (i, 0)),
                pl.BlockSpec((K, N_pad), lambda i: (0, 0)),
                pl.BlockSpec((1, N_pad), lambda i: (0, 0)),
            ],
            out_specs=pl.BlockSpec((TILE_B, N_pad), lambda i: (i, 0)),
        ),
        compiler_params=pltpu.CompilerParams(
            dimension_semantics=("parallel",)),
        cost_estimate=pl.CostEstimate(
            flops=flops, transcendentals=0, bytes_accessed=bytes_accessed),
    )(x_flat, w_fused_bf16, bias_out_f32)

    # Slice off the batch / class padding.
    return logits_padded[:B, :NC]


def _reference_forward(x, params, tau=12.0):
    B, C, H, W = x.shape
    old_std = params["old_std"].reshape(1, C, 1, 1)
    old_mean = params["old_mean"].reshape(1, C, 1, 1)
    new_mean = params["new_mean"].reshape(1, C, 1, 1)
    new_std = params["new_std"].reshape(1, C, 1, 1)
    xn = (x * old_std + old_mean - new_mean) / new_std
    feats = xn.reshape(B, -1) @ params["w_enc"]
    return (tau * feats) @ params["clip_weights"]


if __name__ == "__main__":
    key = jax.random.PRNGKey(0)
    k_x, k_enc, k_clip = jax.random.split(key, 3)

    # Small shapes consistent with the module: 3-channel images (CLIP), 16x16
    # spatial (so the H==32 bicubic branch is not taken), D=128 embedding
    # stand-in, 16 classes.
    B, C, H, W = 2, 3, 16, 16
    D, NC = 128, 16

    x = jax.random.normal(k_x, (B, C, H, W), jnp.float32)
    params = {
        # cf.mean/std[dataset] (CIFAR-10 values) and CLIP's normalization constants
        "old_mean": jnp.array([0.4914, 0.4822, 0.4465], jnp.float32),
        "old_std": jnp.array([0.2470, 0.2435, 0.2616], jnp.float32),
        "new_mean": jnp.array([0.48145466, 0.4578275, 0.40821073], jnp.float32),
        "new_std": jnp.array([0.26862954, 0.26130258, 0.27577711], jnp.float32),
        # deterministic synthetic encoder / zero-shot text weights
        "w_enc": jax.random.normal(k_enc, (C * H * W, D), jnp.float32) * 0.02,
        "clip_weights": jax.random.normal(k_clip, (D, NC), jnp.float32) * 0.02,
    }

    fwd = jax.jit(lambda inp: clip_zero_shot_forward(inp, params, tau=12.0))
    out = fwd(x)
    jax.block_until_ready(out)

    ref = _reference_forward(x, params, tau=12.0)
    assert out.shape == (B, NC)
    # Tolerance accounts for bf16 MXU inputs / fused bf16 weight vs. the f32 reference.
    assert jnp.allclose(out, ref, rtol=2e-2, atol=2e-2), "mismatch vs reference"

    print("KERNEL_OK")
</pallas_src>

<mosaic_0001>
module attributes {stable_mosaic.version = 11 : i64} {
  func.func @_fused_clip_kernel(%arg0: i32, %arg1: memref<16x768xbf16, #tpu.memory_space<vmem>>, %arg2: memref<768x128xbf16, #tpu.memory_space<vmem>>, %arg3: memref<1x128xf32, #tpu.memory_space<vmem>>, %arg4: memref<16x128xf32, #tpu.memory_space<vmem>>) attributes {dimension_semantics = [#tpu.dimension_semantics<parallel>], iteration_bounds = array<i64: 1>, scalar_prefetch = 0 : i64, scratch_operands = 0 : i64, tpu.core_type = #tpu.core_type<tc>, window_params = [{transform_indices = @transform_0, window_bounds = array<i64: 16, 768>}, {pipeline_mode = #tpu.pipeline_mode<synchronous>, transform_indices = @transform_1, window_bounds = array<i64: 768, 128>}, {pipeline_mode = #tpu.pipeline_mode<synchronous>, transform_indices = @transform_2, window_bounds = array<i64: 1, 128>}, {transform_indices = @transform_3, window_bounds = array<i64: 16, 128>}]} {
    %c0 = arith.constant 0 : index
    %c0_0 = arith.constant 0 : index
    %0 = vector.load %arg1[%c0, %c0_0] : memref<16x768xbf16, #tpu.memory_space<vmem>>, vector<16x768xbf16>
    %c0_1 = arith.constant 0 : index
    %c0_2 = arith.constant 0 : index
    %1 = vector.load %arg2[%c0_1, %c0_2] : memref<768x128xbf16, #tpu.memory_space<vmem>>, vector<768x128xbf16>
    %cst = arith.constant dense<0.000000e+00> : vector<16x128xf32>
    %2 = tpu.matmul %0, %1, %cst {dimension_numbers = #tpu.dot_dimension_numbers<[1], [0], [0], [1], [0, 0, 1, 1], [], []>} : vector<16x768xbf16>, vector<768x128xbf16>, vector<16x128xf32> -> vector<16x128xf32>
    %c0_3 = arith.constant 0 : index
    %c0_4 = arith.constant 0 : index
    %3 = vector.load %arg3[%c0_3, %c0_4] : memref<1x128xf32, #tpu.memory_space<vmem>>, vector<1x128xf32>
    %4 = vector.broadcast %3 : vector<1x128xf32> to vector<16x128xf32>
    %5 = arith.addf %2, %4 : vector<16x128xf32>
    %c0_5 = arith.constant 0 : index
    %c0_6 = arith.constant 0 : index
    %6 = vector.load %arg4[%c0_5, %c0_6] : memref<16x128xf32, #tpu.memory_space<vmem>>, vector<16x128xf32>
    tpu.vector_store %arg4[%c0_5, %c0_6], %5 {strides = array<i32>} : memref<16x128xf32, #tpu.memory_space<vmem>>, vector<16x128xf32>,
    return
  }
  func.func @transform_0(%arg0: i32) -> (i32, i32) {
    %c0_i32 = arith.constant 0 : i32
    %c0_i32_0 = arith.constant 0 : i32
    return %arg0, %c0_i32 : i32, i32
  }
  func.func @transform_1(%arg0: i32) -> (i32, i32) {
    %c0_i32 = arith.constant 0 : i32
    %c0_i32_0 = arith.constant 0 : i32
    %c0_i32_1 = arith.constant 0 : i32
    return %c0_i32, %c0_i32_0 : i32, i32
  }
  func.func @transform_2(%arg0: i32) -> (i32, i32) {
    %c0_i32 = arith.constant 0 : i32
    %c0_i32_0 = arith.constant 0 : i32
    %c0_i32_1 = arith.constant 0 : i32
    return %c0_i32, %c0_i32_0 : i32, i32
  }
  func.func @transform_3(%arg0: i32) -> (i32, i32) {
    %c0_i32 = arith.constant 0 : i32
    %c0_i32_0 = arith.constant 0 : i32
    return %arg0, %c0_i32 : i32, i32
  }
}

</mosaic_0001>

<llo_original>
// kernel: mul.5
$region0: #{mul.5}
  %s0 = inlined_call_operand.vmem [shape: f32[3,256], index: 0, kind: input, shape index: {}]
  %s1 = inlined_call_operand.vmem [shape: f32[768], index: 1, kind: output, shape index: {}]
  $region1: #{mul.5} parent=0
    #allocation0 [shape = 'u8[8192]{0}', space=vmem, size = 0x2000, scoped, tag = 'scoped mem for input reshape']
    %s3 = sshllo.u32 0, 4
    %s4 = scalar_lea.vmem %s0, 4
    %v5 = vld [vmem:[%s4] sm:%s3]
    %s6 = scalar_lea.vmem [#allocation0], 8
    %7 = vst [vmem:[%s6] sm:%s3] %v5
    %v8 = vld [vmem:[%s0] sm:%s3]
    %9 = vst [vmem:[#allocation0] sm:%s3] %v8
    %v10 = vld [vmem:[#allocation0] sm:$0x7]
    %11 = vst [vmem:[%s1] ss:$2 sm:$0x7] %v10
    %s12 = scalar_lea.vmem [#allocation0], 8
    %v13 = vld [vmem:[%s12] sm:$0x7]
    %s14 = scalar_lea.vmem %s1, 1
    %15 = vst [vmem:[%s14] ss:$2 sm:$0x7] %v13

// kernel: _lambda_.1
$region0: #{_lambda_.1}
  #allocation0 [shape = 'u32[]', space=smem, size = 0x4, offset = 0x4, fixed_abs, tag = 'smem constant byte address 0x4 - core index']
  #allocation1 [shape = 'u32[144,128]{1,0:T(1,128)}', space=vmem, size = 0x12000, scoped, tag = 'internal scratch']
  %s0 = inlined_call_operand.vmem [shape: bf16[16,768], index: 0, kind: input, shape index: {}]
  %s1 = inlined_call_operand.vmem [shape: bf16[768,128], index: 1, kind: input, shape index: {}]
  %s2 = inlined_call_operand.vmem [shape: f32[1,128], index: 2, kind: input, shape index: {}]
  %s3 = inlined_call_operand.vmem [shape: f32[16,128], index: 3, kind: output, shape index: {}]
  %s4 = sld [smem:[#allocation0]]
  $region22: #{_lambda_.1} parent=0
    _
  %s6 = ssub.s32 1, %s4
  %s7 = scalar_select 0, %s6, %s4
  // Predicated region
  $region2: #{_lambda_.1} parent=0 // pred_check
    _
  $region3: #{_lambda_.1} parent=0 // pred_check_branch
    %9 = sbr.rel (0) target = $region5
  $region4: #{_lambda_.1} parent=0 // pred_region
    _
  $region5: #{_lambda_.1} parent=0 // pred_fallthru
    _
  // Predicated region
  $region6: #{_lambda_.1} parent=0 // pred_check
    _
  $region7: #{_lambda_.1} parent=0 // pred_check_branch
    %11 = sbr.rel (0) target = $region9
  $region8: #{_lambda_.1} parent=0 // pred_region
    _
  $region9: #{_lambda_.1} parent=0 // pred_fallthru
    _
  // Predicated region
  $region10: #{_lambda_.1} parent=0 // pred_check
    _
  $region11: #{_lambda_.1} parent=0 // pred_check_branch
    %13 = sbr.rel (0) target = $region13
  $region12: #{_lambda_.1} parent=0 // pred_region
    _
  $region13: #{_lambda_.1} parent=0 // pred_fallthru
    _
  %v15 = vld [vmem:[%s0] sm:$0xff]
  %v16 = vld [vmem:[%s0 + $0x8] sm:$0xff]
  %v17 = vld [vmem:[%s0 + $0x10] sm:$0xff]
  %v18 = vld [vmem:[%s0 + $0x18] sm:$0xff]
  %v19 = vld [vmem:[%s0 + $0x20] sm:$0xff]
  %v20 = vld [vmem:[%s0 + $0x28] sm:$0xff]
  %v21 = vld [vmem:[%s1] sm:$0xf]
  %v22 = vld [vmem:[%s1 + $0x4] sm:$0xf]
  %v23 = vld [vmem:[%s1 + $0x8] sm:$0xf]
  %v24 = vld [vmem:[%s1 + $0xc] sm:$0xf]
  %v25 = vld [vmem:[%s1 + $0x10] sm:$0xf]
  %v26 = vld [vmem:[%s1 + $0x14] sm:$0xf]
  %v27 = vld [vmem:[%s1 + $0x18] sm:$0xf]
  %v28 = vld [vmem:[%s1 + $0x1c] sm:$0xf]
  %v29 = vld [vmem:[%s1 + $0x20] sm:$0xf]
  %v30 = vld [vmem:[%s1 + $0x24] sm:$0xf]
  %v31 = vld [vmem:[%s1 + $0x28] sm:$0xf]
  %v32 = vld [vmem:[%s1 + $0x2c] sm:$0xf]
  %v33 = vld [vmem:[%s1 + $0x30] sm:$0xf]
  %v34 = vld [vmem:[%s1 + $0x34] sm:$0xf]
  %v35 = vld [vmem:[%s1 + $0x38] sm:$0xf]
  %v36 = vld [vmem:[%s1 + $0x3c] sm:$0xf]
  %v37 = vld [vmem:[%s1 + $0x40] sm:$0xf]
  %v38 = vld [vmem:[%s1 + $0x44] sm:$0xf]
  %v39 = vld [vmem:[%s1 + $0x48] sm:$0xf]
  %v40 = vld [vmem:[%s1 + $0x4c] sm:$0xf]
  %v41 = vld [vmem:[%s1 + $0x50] sm:$0xf]
  %v42 = vld [vmem:[%s1 + $0x54] sm:$0xf]
  %v43 = vld [vmem:[%s1 + $0x58] sm:$0xf]
  %v44 = vld [vmem:[%s1 + $0x5c] sm:$0xf]
  %v45 = vld [vmem:[%s1 + $0x60] sm:$0xf]
  %v46 = vld [vmem:[%s1 + $0x64] sm:$0xf]
  %v47 = vld [vmem:[%s1 + $0x68] sm:$0xf]
  %v48 = vld [vmem:[%s1 + $0x6c] sm:$0xf]
  %v49 = vld [vmem:[%s1 + $0x70] sm:$0xf]
  %v50 = vld [vmem:[%s1 + $0x74] sm:$0xf]
  %v51 = vld [vmem:[%s1 + $0x78] sm:$0xf]
  %v52 = vld [vmem:[%s1 + $0x7c] sm:$0xf]
  %v53 = vld [vmem:[%s1 + $0x80] sm:$0xf]
  %v54 = vld [vmem:[%s1 + $0x84] sm:$0xf]
  %v55 = vld [vmem:[%s1 + $0x88] sm:$0xf]
  %v56 = vld [vmem:[%s1 + $0x8c] sm:$0xf]
  %v57 = vld [vmem:[%s1 + $0x90] sm:$0xf]
  %v58 = vld [vmem:[%s1 + $0x94] sm:$0xf]
  %v59 = vld [vmem:[%s1 + $0x98] sm:$0xf]
  %v60 = vld [vmem:[%s1 + $0x9c] sm:$0xf]
  %v61 = vld [vmem:[%s1 + $0xa0] sm:$0xf]
  %v62 = vld [vmem:[%s1 + $0xa4] sm:$0xf]
  %v63 = vld [vmem:[%s1 + $0xa8] sm:$0xf]
  %v64 = vld [vmem:[%s1 + $0xac] sm:$0xf]
  %v65 = vld [vmem:[%s1 + $0xb0] sm:$0xf]
  %v66 = vld [vmem:[%s1 + $0xb4] sm:$0xf]
  %v67 = vld [vmem:[%s1 + $0xb8] sm:$0xf]
  %v68 = vld [vmem:[%s1 + $0xbc] sm:$0xf]
  %v69 = vld [vmem:[%s1 + $0xc0] sm:$0xf]
  %v70 = vld [vmem:[%s1 + $0xc4] sm:$0xf]
  %v71 = vld [vmem:[%s1 + $0xc8] sm:$0xf]
  %v72 = vld [vmem:[%s1 + $0xcc] sm:$0xf]
  %v73 = vld [vmem:[%s1 + $0xd0] sm:$0xf]
  %v74 = vld [vmem:[%s1 + $0xd4] sm:$0xf]
  %v75 = vld [vmem:[%s1 + $0xd8] sm:$0xf]
  %v76 = vld [vmem:[%s1 + $0xdc] sm:$0xf]
  %v77 = vld [vmem:[%s1 + $0xe0] sm:$0xf]
  %v78 = vld [vmem:[%s1 + $0xe4] sm:$0xf]
  %v79 = vld [vmem:[%s1 + $0xe8] sm:$0xf]
  %v80 = vld [vmem:[%s1 + $0xec] sm:$0xf]
  %v81 = vld [vmem:[%s1 + $0xf0] sm:$0xf]
  %v82 = vld [vmem:[%s1 + $0xf4] sm:$0xf]
  %v83 = vld [vmem:[%s1 + $0xf8] sm:$0xf]
  %v84 = vld [vmem:[%s1 + $0xfc] sm:$0xf]
  %v85 = vld [vmem:[%s1 + $0x100] sm:$0xf]
  %v86 = vld [vmem:[%s1 + $0x104] sm:$0xf]
  %v87 = vld [vmem:[%s1 + $0x108] sm:$0xf]
  %v88 = vld [vmem:[%s1 + $0x10c] sm:$0xf]
  %v89 = vld [vmem:[%s1 + $0x110] sm:$0xf]
  %v90 = vld [vmem:[%s1 + $0x114] sm:$0xf]
  %v91 = vld [vmem:[%s1 + $0x118] sm:$0xf]
  %v92 = vld [vmem:[%s1 + $0x11c] sm:$0xf]
  %v93 = vld [vmem:[%s1 + $0x120] sm:$0xf]
  %v94 = vld [vmem:[%s1 + $0x124] sm:$0xf]
  %v95 = vld [vmem:[%s1 + $0x128] sm:$0xf]
  %v96 = vld [vmem:[%s1 + $0x12c] sm:$0xf]
  %v97 = vld [vmem:[%s1 + $0x130] sm:$0xf]
  %v98 = vld [vmem:[%s1 + $0x134] sm:$0xf]
  %v99 = vld [vmem:[%s1 + $0x138] sm:$0xf]
  %v100 = vld [vmem:[%s1 + $0x13c] sm:$0xf]
  %v101 = vld [vmem:[%s1 + $0x140] sm:$0xf]
  %v102 = vld [vmem:[%s1 + $0x144] sm:$0xf]
  %v103 = vld [vmem:[%s1 + $0x148] sm:$0xf]
  %v104 = vld [vmem:[%s1 + $0x14c] sm:$0xf]
  %v105 = vld [vmem:[%s1 + $0x150] sm:$0xf]
  %v106 = vld [vmem:[%s1 + $0x154] sm:$0xf]
  %v107 = vld [vmem:[%s1 + $0x158] sm:$0xf]
  %v108 = vld [vmem:[%s1 + $0x15c] sm:$0xf]
  %v109 = vld [vmem:[%s1 + $0x160] sm:$0xf]
  %v110 = vld [vmem:[%s1 + $0x164] sm:$0xf]
  %v111 = vld [vmem:[%s1 + $0x168] sm:$0xf]
  %v112 = vld [vmem:[%s1 + $0x16c] sm:$0xf]
  %v113 = vld [vmem:[%s1 + $0x170] sm:$0xf]
  %v114 = vld [vmem:[%s1 + $0x174] sm:$0xf]
  %v115 = vld [vmem:[%s1 + $0x178] sm:$0xf]
  %v116 = vld [vmem:[%s1 + $0x17c] sm:$0xf]
  %v117 = vld [vmem:[%s2] sm:$0x1]
  %v119 = vlaneseq
  %v120 = vshrl.u32 %v119, 7
  %v121 = vsub.s32 0, %v120
  %v122 = vrot.slane %v117, %v121
  %v130 = vunpack.c.l.b16 %v15
  %v131 = vunpack.c.h.b16 %v15
  %v132 = vunpack.c.l.b16 %v16
  %v133 = vunpack.c.h.b16 %v16
  %v134 = vunpack.c.l.b16 %v17
  %v135 = vunpack.c.h.b16 %v17
  %v136 = vunpack.c.l.b16 %v18
  %v137 = vunpack.c.h.b16 %v18
  %v138 = vunpack.c.l.b16 %v19
  %v139 = vunpack.c.h.b16 %v19
  %v140 = vunpack.c.l.b16 %v20
  %v141 = vunpack.c.h.b16 %v20
  %v142 = vpack.c.b16 %v136, %v130
  %v143 = vpack.c.b16 %v137, %v131
  %v144 = vpack.c.b16 %v138, %v132
  %v145 = vpack.c.b16 %v139, %v133
  %v146 = vpack.c.b16 %v140, %v134
  %v147 = vpack.c.b16 %v141, %v135
  %v250 = vunpack.c.l.b16 %v21
  %v251 = vunpack.c.l.b16 %v22
  %v252 = vunpack.c.l.b16 %v23
  %v253 = vunpack.c.l.b16 %v24
  %v254 = vunpack.c.l.b16 %v25
  %v255 = vunpack.c.l.b16 %v26
  %v256 = vunpack.c.l.b16 %v27
  %v257 = vunpack.c.l.b16 %v28
  %v258 = vunpack.c.l.b16 %v29
  %v259 = vunpack.c.l.b16 %v30
  %v260 = vunpack.c.l.b16 %v31
  %v261 = vunpack.c.l.b16 %v32
  %v262 = vunpack.c.l.b16 %v33
  %v263 = vunpack.c.l.b16 %v34
  %v264 = vunpack.c.l.b16 %v35
  %v265 = vunpack.c.l.b16 %v36
  %v266 = vunpack.c.l.b16 %v37
  %v267 = vunpack.c.l.b16 %v38
  %v268 = vunpack.c.l.b16 %v39
  %v269 = vunpack.c.l.b16 %v40
  %v270 = vunpack.c.l.b16 %v41
  %v271 = vunpack.c.l.b16 %v42
  %v272 = vunpack.c.l.b16 %v43
  %v273 = vunpack.c.l.b16 %v44
  %v274 = vunpack.c.l.b16 %v45
  %v275 = vunpack.c.l.b16 %v46
  %v276 = vunpack.c.l.b16 %v47
  %v277 = vunpack.c.l.b16 %v48
  %v278 = vunpack.c.l.b16 %v49
  %v279 = vunpack.c.l.b16 %v50
  %v280 = vunpack.c.l.b16 %v51
  %v281 = vunpack.c.l.b16 %v52
  %v282 = vunpack.c.l.b16 %v53
  %v283 = vunpack.c.l.b16 %v54
  %v284 = vunpack.c.l.b16 %v55
  %v285 = vunpack.c.l.b16 %v56
  %v286 = vunpack.c.l.b16 %v57
  %v287 = vunpack.c.l.b16 %v58
  %v288 = vunpack.c.l.b16 %v59
  %v289 = vunpack.c.l.b16 %v60
  %v290 = vunpack.c.l.b16 %v61
  %v291 = vunpack.c.l.b16 %v62
  %v292 = vunpack.c.l.b16 %v63
  %v293 = vunpack.c.l.b16 %v64
  %v294 = vunpack.c.l.b16 %v65
  %v295 = vunpack.c.l.b16 %v66
  %v296 = vunpack.c.l.b16 %v67
  %v297 = vunpack.c.l.b16 %v68
  %v298 = vunpack.c.l.b16 %v69
  %v299 = vunpack.c.l.b16 %v70
  %v300 = vunpack.c.l.b16 %v71
  %v301 = vunpack.c.l.b16 %v72
  %v302 = vunpack.c.l.b16 %v73
  %v303 = vunpack.c.l.b16 %v74
  %v304 = vunpack.c.l.b16 %v75
  %v305 = vunpack.c.l.b16 %v76
  %v306 = vunpack.c.l.b16 %v77
  %v307 = vunpack.c.l.b16 %v78
  %v308 = vunpack.c.l.b16 %v79
  %v309 = vunpack.c.l.b16 %v80
  %v310 = vunpack.c.l.b16 %v81
  %v311 = vunpack.c.l.b16 %v82
  %v312 = vunpack.c.l.b16 %v83
  %v313 = vunpack.c.l.b16 %v84
  %v314 = vunpack.c.l.b16 %v85
  %v315 = vunpack.c.l.b16 %v86
  %v316 = vunpack.c.l.b16 %v87
  %v317 = vunpack.c.l.b16 %v88
  %v318 = vunpack.c.l.b16 %v89
  %v319 = vunpack.c.l.b16 %v90
  %v320 = vunpack.c.l.b16 %v91
  %v321 = vunpack.c.l.b16 %v92
  %v322 = vunpack.c.l.b16 %v93
  %v323 = vunpack.c.l.b16 %v94
  %v324 = vunpack.c.l.b16 %v95
  %v325 = vunpack.c.l.b16 %v96
  %v326 = vunpack.c.l.b16 %v97
  %v327 = vunpack.c.l.b16 %v98
  %v328 = vunpack.c.l.b16 %v99
  %v329 = vunpack.c.l.b16 %v100
  %v330 = vunpack.c.l.b16 %v101
  %v331 = vunpack.c.l.b16 %v102
  %v332 = vunpack.c.l.b16 %v103
  %v333 = vunpack.c.l.b16 %v104
  %v334 = vunpack.c.l.b16 %v105
  %v335 = vunpack.c.l.b16 %v106
  %v336 = vunpack.c.l.b16 %v107
  %v337 = vunpack.c.l.b16 %v108
  %v338 = vunpack.c.l.b16 %v109
  %v339 = vunpack.c.l.b16 %v110
  %v340 = vunpack.c.l.b16 %v111
  %v341 = vunpack.c.l.b16 %v112
  %v342 = vunpack.c.l.b16 %v113
  %v343 = vunpack.c.l.b16 %v114
  %v344 = vunpack.c.l.b16 %v115
  %v345 = vunpack.c.l.b16 %v116
  %v346 = vpack.c.b16 %v251, %v250
  %v347 = vpack.c.b16 %v253, %v252
  %v348 = vpack.c.b16 %v255, %v254
  %v349 = vpack.c.b16 %v257, %v256
  %v350 = vpack.c.b16 %v259, %v258
  %v351 = vpack.c.b16 %v261, %v260
  %v352 = vpack.c.b16 %v263, %v262
  %v353 = vpack.c.b16 %v265, %v264
  %v354 = vpack.c.b16 %v267, %v266
  %v355 = vpack.c.b16 %v269, %v268
  %v356 = vpack.c.b16 %v271, %v270
  %v357 = vpack.c.b16 %v273, %v272
  %v358 = vpack.c.b16 %v275, %v274
  %v359 = vpack.c.b16 %v277, %v276
  %v360 = vpack.c.b16 %v279, %v278
  %v361 = vpack.c.b16 %v281, %v280
  %v362 = vpack.c.b16 %v283, %v282
  %v363 = vpack.c.b16 %v285, %v284
  %v364 = vpack.c.b16 %v287, %v286
  %v365 = vpack.c.b16 %v289, %v288
  %v366 = vpack.c.b16 %v291, %v290
  %v367 = vpack.c.b16 %v293, %v292
  %v368 = vpack.c.b16 %v295, %v294
  %v369 = vpack.c.b16 %v297, %v296
  %v370 = vpack.c.b16 %v299, %v298
  %v371 = vpack.c.b16 %v301, %v300
  %v372 = vpack.c.b16 %v303, %v302
  %v373 = vpack.c.b16 %v305, %v304
  %v374 = vpack.c.b16 %v307, %v306
  %v375 = vpack.c.b16 %v309, %v308
  %v376 = vpack.c.b16 %v311, %v310
  %v377 = vpack.c.b16 %v313, %v312
  %v378 = vpack.c.b16 %v315, %v314
  %v379 = vpack.c.b16 %v317, %v316
  %v380 = vpack.c.b16 %v319, %v318
  %v381 = vpack.c.b16 %v321, %v320
  %v382 = vpack.c.b16 %v323, %v322
  %v383 = vpack.c.b16 %v325, %v324
  %v384 = vpack.c.b16 %v327, %v326
  %v385 = vpack.c.b16 %v329, %v328
  %v386 = vpack.c.b16 %v331, %v330
  %v387 = vpack.c.b16 %v333, %v332
  %v388 = vpack.c.b16 %v335, %v334
  %v389 = vpack.c.b16 %v337, %v336
  %v390 = vpack.c.b16 %v339, %v338
  %v391 = vpack.c.b16 %v341, %v340
  %v392 = vpack.c.b16 %v343, %v342
  %v393 = vpack.c.b16 %v345, %v344
  %442 = vmatprep.subr.bf16.mxu0 0
  %443 = vmatpush1.bf16.msra.mxu0 %v346
  %444 = vmatprep.subr.bf16.mxu0 0
  %445 = vmatpush1.bf16.msra.mxu0 %v347
  %446 = vmatprep.subr.bf16.mxu0 0
  %447 = vmatpush1.bf16.msra.mxu0 %v348
  %448 = vmatprep.subr.bf16.mxu0 0
  %449 = vmatpush1.bf16.msra.mxu0 %v349
  %450 = vmatprep.subr.bf16.mxu0 0
  %451 = vmatpush1.bf16.msra.mxu0 %v350
  %452 = vmatprep.subr.bf16.mxu0 0
  %453 = vmatpush1.bf16.msra.mxu0 %v351
  %454 = vmatprep.subr.bf16.mxu0 0
  %455 = vmatpush1.bf16.msra.mxu0 %v352
  %456 = vmatprep.subr.bf16.mxu0 0
  %457 = vmatpush1.bf16.msra.mxu0 %v353
  %458 = vmatprep.subr.bf16.mxu0 0
  %459 = vmatpush1.bf16.msra.mxu0 %v354
  %460 = vmatprep.subr.bf16.mxu0 0
  %461 = vmatpush1.bf16.msra.mxu0 %v355
  %462 = vmatprep.subr.bf16.mxu0 0
  %463 = vmatpush1.bf16.msra.mxu0 %v356
  %464 = vmatprep.subr.bf16.mxu0 0
  %465 = vmatpush1.bf16.msra.mxu0 %v357
  %466 = vmatprep.subr.bf16.mxu0 0
  %467 = vmatpush1.bf16.msra.mxu0 %v358
  %468 = vmatprep.subr.bf16.mxu0 0
  %469 = vmatpush1.bf16.msra.mxu0 %v359
  %470 = vmatprep.subr.bf16.mxu0 0
  %471 = vmatpush1.bf16.msra.mxu0 %v360
  %472 = vmatprep.subr.bf16.mxu0 0
  %473 = vmatpush1.bf16.msra.mxu0 %v361
  %474 = vmatprep.mubr.bf16.mxu0 %v143
  %475 = vmatmul.mubr.bf16.gmra.mrb[0].mxu0 %v142
  %v476 = vpop.f32.mrb[0].mxu0
  %v477 = vadd.f32 %v122, %v476
  %v478 = vpop.f32.mrb[0].mxu0
  %v479 = vpop.f32.mrb[0].mxu0
  %v480 = vadd.f32 %v122, %v479
  %v481 = vpop.f32.mrb[0].mxu0
  %482 = vdwg.mxu0
  %483 = vmatprep.subr.bf16.mxu0 0
  %484 = vmatpush1.bf16.msra.mxu0 %v362
  %485 = vmatprep.subr.bf16.mxu0 0
  %486 = vmatpush1.bf16.msra.mxu0 %v363
  %487 = vmatprep.subr.bf16.mxu0 0
  %488 = vmatpush1.bf16.msra.mxu0 %v364
  %489 = vmatprep.subr.bf16.mxu0 0
  %490 = vmatpush1.bf16.msra.mxu0 %v365
  %491 = vmatprep.subr.bf16.mxu0 0
  %492 = vmatpush1.bf16.msra.mxu0 %v366
  %493 = vmatprep.subr.bf16.mxu0 0
  %494 = vmatpush1.bf16.msra.mxu0 %v367
  %495 = vmatprep.subr.bf16.mxu0 0
  %496 = vmatpush1.bf16.msra.mxu0 %v368
  %497 = vmatprep.subr.bf16.mxu0 0
  %498 = vmatpush1.bf16.msra.mxu0 %v369
  %499 = vmatprep.subr.bf16.mxu0 0
  %500 = vmatpush1.bf16.msra.mxu0 %v370
  %501 = vmatprep.subr.bf16.mxu0 0
  %502 = vmatpush1.bf16.msra.mxu0 %v371
  %503 = vmatprep.subr.bf16.mxu0 0
  %504 = vmatpush1.bf16.msra.mxu0 %v372
  %505 = vmatprep.subr.bf16.mxu0 0
  %506 = vmatpush1.bf16.msra.mxu0 %v373
  %507 = vmatprep.subr.bf16.mxu0 0
  %508 = vmatpush1.bf16.msra.mxu0 %v374
  %509 = vmatprep.subr.bf16.mxu0 0
  %510 = vmatpush1.bf16.msra.mxu0 %v375
  %511 = vmatprep.subr.bf16.mxu0 0
  %512 = vmatpush1.bf16.msra.mxu0 %v376
  %513 = vmatprep.subr.bf16.mxu0 0
  %514 = vmatpush1.bf16.msra.mxu0 %v377
  %515 = vmatprep.mubr.bf16.mxu0 %v145
  %516 = vmatmul.mubr.bf16.gmra.mrb[0].mxu0 %v144
  %v517 = vpop.f32.mrb[0].mxu0
  %v518 = vadd.f32 %v477, %v517
  %v519 = vpop.f32.mrb[0].mxu0
  %v520 = vpop.f32.mrb[0].mxu0
  %v521 = vadd.f32 %v480, %v520
  %v522 = vpop.f32.mrb[0].mxu0
  %523 = vdwg.mxu0
  %524 = vmatprep.subr.bf16.mxu0 0
  %525 = vmatpush1.bf16.msra.mxu0 %v378
  %526 = vmatprep.subr.bf16.mxu0 0
  %527 = vmatpush1.bf16.msra.mxu0 %v379
  %528 = vmatprep.subr.bf16.mxu0 0
  %529 = vmatpush1.bf16.msra.mxu0 %v380
  %530 = vmatprep.subr.bf16.mxu0 0
  %531 = vmatpush1.bf16.msra.mxu0 %v381
  %532 = vmatprep.subr.bf16.mxu0 0
  %533 = vmatpush1.bf16.msra.mxu0 %v382
  %534 = vmatprep.subr.bf16.mxu0 0
  %535 = vmatpush1.bf16.msra.mxu0 %v383
  %536 = vmatprep.subr.bf16.mxu0 0
  %537 = vmatpush1.bf16.msra.mxu0 %v384
  %538 = vmatprep.subr.bf16.mxu0 0
  %539 = vmatpush1.bf16.msra.mxu0 %v385
  %540 = vmatprep.subr.bf16.mxu0 0
  %541 = vmatpush1.bf16.msra.mxu0 %v386
  %542 = vmatprep.subr.bf16.mxu0 0
  %543 = vmatpush1.bf16.msra.mxu0 %v387
  %544 = vmatprep.subr.bf16.mxu0 0
  %545 = vmatpush1.bf16.msra.mxu0 %v388
  %546 = vmatprep.subr.bf16.mxu0 0
  %547 = vmatpush1.bf16.msra.mxu0 %v389
  %548 = vmatprep.subr.bf16.mxu0 0
  %549 = vmatpush1.bf16.msra.mxu0 %v390
  %550 = vmatprep.subr.bf16.mxu0 0
  %551 = vmatpush1.bf16.msra.mxu0 %v391
  %552 = vmatprep.subr.bf16.mxu0 0
  %553 = vmatpush1.bf16.msra.mxu0 %v392
  %554 = vmatprep.subr.bf16.mxu0 0
  %555 = vmatpush1.bf16.msra.mxu0 %v393
  %556 = vmatprep.mubr.bf16.mxu0 %v147
  %557 = vmatmul.mubr.bf16.gmra.mrb[0].mxu0 %v146
  %v558 = vpop.f32.mrb[0].mxu0
  %v559 = vadd.f32 %v518, %v558
  %v560 = vpop.f32.mrb[0].mxu0
  %v561 = vpop.f32.mrb[0].mxu0
  %v562 = vadd.f32 %v521, %v561
  %v563 = vpop.f32.mrb[0].mxu0
  %564 = vdwg.mxu0
  %565 = vst [vmem:[%s3] sm:$0xff] %v559
  %566 = vst [vmem:[%s3 + $0x8] sm:$0xff] %v562
  // Predicated region
  $region14: #{_lambda_.1} parent=0 // pred_check
    _
  $region15: #{_lambda_.1} parent=0 // pred_check_branch
    %568 = sbr.rel (0) target = $region17
  $region16: #{_lambda_.1} parent=0 // pred_region
    _
  $region17: #{_lambda_.1} parent=0 // pred_fallthru
    _
  // Predicated region
  $region18: #{_lambda_.1} parent=0 // pred_check
    _
  $region19: #{_lambda_.1} parent=0 // pred_check_branch
    %570 = sbr.rel (0) target = $region21
  $region20: #{_lambda_.1} parent=0 // pred_region
    _
  $region21: #{_lambda_.1} parent=0 // pred_fallthru
    _

</llo_original>
